<compile_context>
chip_gen: v5e
topology: v5e:2x2
jax: 0.10.0
libtpu: 0.0.40
codegen_flags: <defaults>
</compile_context>

<pallas_src>
import functools

import jax
import jax.numpy as jnp
from jax.experimental import pallas as pl
from jax.experimental.pallas import tpu as pltpu


def _floss_kernel(coords_ref, inp_ref, tgt_ref, out_ref, *,
                  image_width, frames_per_block, num_frames,
                  needs_mask, out_lanes):
    F = frames_per_block

    p = inp_ref[...].astype(jnp.float32)     # (F, L) predicted probabilities
    t = tgt_ref[...].astype(jnp.float32)     # (F, L) targets
    L = p.shape[-1]

    row = coords_ref[0:1, :]                 # (1, L) row index of each pixel
    col = coords_ref[1:2, :]                 # (1, L) col index of each pixel

    # Per-frame centroid of argmax positions (ties averaged), matching
    # torch.where(target_im == torch.max(target_im)) followed by .mean().
    m = jnp.max(t, axis=-1, keepdims=True)                        # (F, 1)
    msk = (t == m).astype(jnp.float32)                            # (F, L)
    cnt = jnp.sum(msk, axis=-1, keepdims=True)                    # (F, 1)
    x_mean = jnp.sum(msk * row, axis=-1, keepdims=True) / cnt     # (F, 1)
    y_mean = jnp.sum(msk * col, axis=-1, keepdims=True) / cnt     # (F, 1)

    # dist = (sqrt((i - x)^2 + (j - y)^2) + 1) / W ; weight = 1 / dist.
    a = row - x_mean                                              # (F, L)
    b = col - y_mean                                              # (F, L)
    d = jnp.sqrt(a * a + b * b) + 1.0
    # EUP approx reciprocal + one Newton-Raphson step (recovers ~f32 accuracy;
    # passes the 1e-5 check, unlike bare approx).
    r = pl.reciprocal(d, approx=True)
    r = r * (2.0 - d * r)
    weight = jnp.float32(image_width) * r

    # binary_cross_entropy with per-element weight; PyTorch clamps log at -100.
    log_p = jnp.maximum(jnp.log(p), -100.0)
    log_1mp = jnp.maximum(jnp.log(1.0 - p), -100.0)
    bce = -weight * (t * log_p + (1.0 - t) * log_1mp)             # (F, L)

    if needs_mask:
        # Ragged last block: rows >= num_frames come from out-of-bounds reads
        # (unspecified data).  Select, don't multiply, so NaN/Inf can't leak.
        i = pl.program_id(0)
        fid = i * F + jax.lax.broadcasted_iota(jnp.int32, (F, 1), 0)
        bce = jnp.where(fid < num_frames, bce, 0.0)

    # Fold frames onto 8 sublanes (leading-axis reduce = cheap vreg adds) ...
    s = jnp.sum(bce.reshape(F // 8, 8, L), axis=0)                # (8, L)
    # ... then fold 128-lane chunks with static lane-aligned slices + adds so
    # the writeback is a tiny, 128-lane-dense (8, out_lanes) slab.
    if out_lanes != L:
        acc = s[:, 0:out_lanes]
        for k in range(1, L // out_lanes):
            acc = acc + s[:, k * out_lanes:(k + 1) * out_lanes]
        s = acc
    out_ref[...] = s[None]                                        # (1, 8, out_lanes)


def _cdiv(a, b):
    return -(-a // b)


def _device_kind():
    try:
        return jax.devices()[0].device_kind.lower()
    except Exception:
        return ""


def _vmem_physical_bytes(kind):
    if "v7" in kind or "7x" in kind:
        return 64 * 1024 * 1024
    if "v5" in kind or "v6" in kind:
        return 128 * 1024 * 1024
    try:
        cap = getattr(pltpu.get_tpu_info(), "vmem_capacity_bytes", None)
        if cap:
            return int(cap)
    except Exception:
        pass
    return 64 * 1024 * 1024          # conservative default


def floss(input_arr, target):
    """input_arr: (B, 1, T, H, W) probabilities; target: (B, T, H, W) in [0, 1]."""
    B, T, H, W = target.shape
    assert H == W, "FLoss weight construction assumes square frames"
    N = B * T
    L = H * W
    total_elems = N * L

    # Lane-dense layout: one frame per row.  Stream at the native dtype
    # (kernel upcasts internally) -- no forced host-side f32 copy.
    inp = jnp.reshape(input_arr, (N, L))   # squeeze(1) + flatten
    tgt = jnp.reshape(target, (N, L))

    # Coordinate planes (row index, col index) of each flattened pixel,
    # passed once as a tiny resident input.
    idx = jnp.arange(L, dtype=jnp.int32)
    coords = jnp.stack(
        [(idx // W).astype(jnp.float32), (idx % W).astype(jnp.float32)], axis=0
    )                                                           # (2, L)

    # Fold partials to 128 lanes in-kernel when cheap (cap the unroll length).
    out_lanes = 128 if (L % 128 == 0 and L // 128 <= 256) else L

    # ---- Block sizing against an explicit per-generation VMEM budget. ----
    kind = _device_kind()
    phys = _vmem_physical_bytes(kind)
    budget = max(32 * 1024 * 1024, min(int(phys * 0.6), 96 * 1024 * 1024))

    in_item = inp.dtype.itemsize
    tgt_item = tgt.dtype.itemsize
    # Double-buffered input blocks + ~6 f32 working-set temporaries per frame.
    per_frame_bytes = 2 * (in_item + tgt_item) * L + 6 * 4 * L
    fixed_bytes = 2 * (2 * L * 4) + 2 * (8 * out_lanes * 4)   # coords + output
    avail = budget - fixed_bytes
    f_fit = avail // per_frame_bytes if per_frame_bytes > 0 else 0
    F = (f_fit // 8) * 8
    if F < 8:
        # TODO(synk): add an L-tiling fallback for very large frames.
        raise ValueError(
            f"frame of {L} pixels does not fit the {budget}-byte VMEM budget")

    n_pad8 = _cdiv(N, 8) * 8
    F = min(F, n_pad8)
    G = _cdiv(N, F)

    # v7x has two TensorCores sharing the "parallel" grid axis: ensure >= 2
    # grid steps so both cores get work (keep F maximal on single-TC chips).
    if ("v7" in kind or "7x" in kind or kind == "") and G < 2 and n_pad8 >= 16:
        F = max(8, ((F // 2) // 8) * 8)
        G = _cdiv(N, F)

    needs_mask = (N % F) != 0

    kernel = functools.partial(
        _floss_kernel,
        image_width=W,
        frames_per_block=F,
        num_frames=N,
        needs_mask=needs_mask,
        out_lanes=out_lanes,
    )

    partials = pl.pallas_call(
        kernel,
        out_shape=jax.ShapeDtypeStruct((G, 8, out_lanes), jnp.float32),
        grid_spec=pltpu.PrefetchScalarGridSpec(
            num_scalar_prefetch=0,
            grid=(G,),
            in_specs=[
                pl.BlockSpec((2, L), lambda i: (0, 0)),   # coords: resident
                pl.BlockSpec((F, L), lambda i: (i, 0)),   # input frames
                pl.BlockSpec((F, L), lambda i: (i, 0)),   # target frames
            ],
            out_specs=pl.BlockSpec((1, 8, out_lanes), lambda i: (i, 0, 0)),
        ),
        compiler_params=pltpu.CompilerParams(
            dimension_semantics=("parallel",),
            vmem_limit_bytes=int(budget)),
    )(coords, inp, tgt)

    return jnp.sum(partials) / jnp.float32(total_elems)


def _floss_reference(input_arr, target):
    """Plain-JAX reference for validation."""
    B, T, H, W = target.shape
    p = jnp.reshape(input_arr, (B * T, H, W)).astype(jnp.float32)
    t = jnp.reshape(target, (B * T, H, W)).astype(jnp.float32)
    row = jax.lax.broadcasted_iota(jnp.float32, (H, W), 0)[None]
    col = jax.lax.broadcasted_iota(jnp.float32, (H, W), 1)[None]
    m = jnp.max(t, axis=(1, 2), keepdims=True)
    mask = (t == m).astype(jnp.float32)
    cnt = jnp.sum(mask, axis=(1, 2), keepdims=True)
    x_mean = jnp.sum(mask * row, axis=(1, 2), keepdims=True) / cnt
    y_mean = jnp.sum(mask * col, axis=(1, 2), keepdims=True) / cnt
    dist = jnp.sqrt((row - x_mean) ** 2 + (col - y_mean) ** 2)
    w = jnp.float32(W) / (dist + 1.0)
    log_p = jnp.maximum(jnp.log(p), -100.0)
    log_1mp = jnp.maximum(jnp.log(1.0 - p), -100.0)
    return jnp.mean(-w * (t * log_p + (1.0 - t) * log_1mp))


if __name__ == "__main__":
    B, T, H, W = 2, 4, 16, 16
    key = jax.random.PRNGKey(0)
    k_in, k_tgt = jax.random.split(key)

    # input: probabilities in (0, 1) with the extra channel dim (B, 1, T, H, W)
    input_arr = jax.nn.sigmoid(
        jax.random.normal(k_in, (B, 1, T, H, W), dtype=jnp.float32))
    # target: values in [0, 1]
    target = jax.random.uniform(k_tgt, (B, T, H, W), dtype=jnp.float32)

    loss = floss(input_arr, target)
    loss = jax.block_until_ready(loss)

    ref = _floss_reference(input_arr, target)
    assert jnp.allclose(loss, ref, rtol=1e-5, atol=1e-5), (loss, ref)

    print("KERNEL_OK")
</pallas_src>

<mosaic_0001>
module attributes {stable_mosaic.version = 11 : i64} {
  func.func @_floss_kernel(%arg0: i32, %arg1: memref<2x256xf32, #tpu.memory_space<vmem>>, %arg2: memref<8x256xf32, #tpu.memory_space<vmem>>, %arg3: memref<8x256xf32, #tpu.memory_space<vmem>>, %arg4: memref<1x8x128xf32, #tpu.memory_space<vmem>>) attributes {dimension_semantics = [#tpu.dimension_semantics<parallel>], iteration_bounds = array<i64: 1>, scalar_prefetch = 0 : i64, scratch_operands = 0 : i64, tpu.core_type = #tpu.core_type<tc>, window_params = [{pipeline_mode = #tpu.pipeline_mode<synchronous>, transform_indices = @transform_0, window_bounds = array<i64: 2, 256>}, {transform_indices = @transform_1, window_bounds = array<i64: 8, 256>}, {transform_indices = @transform_2, window_bounds = array<i64: 8, 256>}, {transform_indices = @transform_3, window_bounds = array<i64: 1, 8, 128>}]} {
    %c0 = arith.constant 0 : index
    %c0_0 = arith.constant 0 : index
    %0 = vector.load %arg2[%c0, %c0_0] : memref<8x256xf32, #tpu.memory_space<vmem>>, vector<8x256xf32>
    %c0_1 = arith.constant 0 : index
    %c0_2 = arith.constant 0 : index
    %1 = vector.load %arg3[%c0_1, %c0_2] : memref<8x256xf32, #tpu.memory_space<vmem>>, vector<8x256xf32>
    %c0_3 = arith.constant 0 : index
    %c0_4 = arith.constant 0 : index
    %2 = vector.load %arg1[%c0_3, %c0_4] : memref<2x256xf32, #tpu.memory_space<vmem>>, vector<1x256xf32>
    %c1 = arith.constant 1 : index
    %c0_5 = arith.constant 0 : index
    %3 = vector.load %arg1[%c1, %c0_5] : memref<2x256xf32, #tpu.memory_space<vmem>>, vector<1x256xf32>
    %cst = arith.constant dense<0xFF800000> : vector<8xf32>
    %4 = vector.multi_reduction <maximumf>, %1, %cst [1] : vector<8x256xf32> to vector<8xf32>
    %5 = vector.shape_cast %4 : vector<8xf32> to vector<8x1xf32>
    %6 = vector.broadcast %5 : vector<8x1xf32> to vector<8x256xf32>
    %7 = arith.cmpf oeq, %1, %6 : vector<8x256xf32>
    %8 = arith.extui %7 : vector<8x256xi1> to vector<8x256xi32>
    %9 = arith.sitofp %8 : vector<8x256xi32> to vector<8x256xf32>
    %cst_6 = arith.constant dense<0.000000e+00> : vector<8xf32>
    %10 = vector.multi_reduction <add>, %9, %cst_6 [1] : vector<8x256xf32> to vector<8xf32>
    %11 = vector.shape_cast %10 : vector<8xf32> to vector<8x1xf32>
    %12 = vector.broadcast %2 : vector<1x256xf32> to vector<8x256xf32>
    %13 = arith.mulf %9, %12 : vector<8x256xf32>
    %cst_7 = arith.constant dense<0.000000e+00> : vector<8xf32>
    %14 = vector.multi_reduction <add>, %13, %cst_7 [1] : vector<8x256xf32> to vector<8xf32>
    %15 = vector.shape_cast %14 : vector<8xf32> to vector<8x1xf32>
    %16 = arith.divf %15, %11 : vector<8x1xf32>
    %17 = vector.broadcast %3 : vector<1x256xf32> to vector<8x256xf32>
    %18 = arith.mulf %9, %17 : vector<8x256xf32>
    %cst_8 = arith.constant dense<0.000000e+00> : vector<8xf32>
    %19 = vector.multi_reduction <add>, %18, %cst_8 [1] : vector<8x256xf32> to vector<8xf32>
    %20 = vector.shape_cast %19 : vector<8xf32> to vector<8x1xf32>
    %21 = arith.divf %20, %11 : vector<8x1xf32>
    %22 = vector.broadcast %2 : vector<1x256xf32> to vector<8x256xf32>
    %23 = vector.broadcast %16 : vector<8x1xf32> to vector<8x256xf32>
    %24 = arith.subf %22, %23 : vector<8x256xf32>
    %25 = vector.broadcast %3 : vector<1x256xf32> to vector<8x256xf32>
    %26 = vector.broadcast %21 : vector<8x1xf32> to vector<8x256xf32>
    %27 = arith.subf %25, %26 : vector<8x256xf32>
    %28 = arith.mulf %24, %24 : vector<8x256xf32>
    %29 = arith.mulf %27, %27 : vector<8x256xf32>
    %30 = arith.addf %28, %29 : vector<8x256xf32>
    %31 = math.sqrt %30 : vector<8x256xf32>
    %cst_9 = arith.constant 1.000000e+00 : f32
    %32 = vector.broadcast %cst_9 : f32 to vector<8x256xf32>
    %33 = arith.addf %31, %32 : vector<8x256xf32>
    %34 = tpu.reciprocal %33 {approx = true} : vector<8x256xf32> -> vector<8x256xf32>
    %35 = arith.mulf %33, %34 : vector<8x256xf32>
    %cst_10 = arith.constant 2.000000e+00 : f32
    %36 = vector.broadcast %cst_10 : f32 to vector<8x256xf32>
    %37 = arith.subf %36, %35 : vector<8x256xf32>
    %38 = arith.mulf %34, %37 : vector<8x256xf32>
    %cst_11 = arith.constant 1.600000e+01 : f32
    %39 = vector.broadcast %cst_11 : f32 to vector<8x256xf32>
    %40 = arith.mulf %39, %38 : vector<8x256xf32>
    %41 = math.log %0 : vector<8x256xf32>
    %cst_12 = arith.constant -1.000000e+02 : f32
    %42 = vector.broadcast %cst_12 : f32 to vector<8x256xf32>
    %43 = arith.maximumf %41, %42 : vector<8x256xf32>
    %cst_13 = arith.constant 1.000000e+00 : f32
    %44 = vector.broadcast %cst_13 : f32 to vector<8x256xf32>
    %45 = arith.subf %44, %0 : vector<8x256xf32>
    %46 = math.log %45 : vector<8x256xf32>
    %cst_14 = arith.constant -1.000000e+02 : f32
    %47 = vector.broadcast %cst_14 : f32 to vector<8x256xf32>
    %48 = arith.maximumf %46, %47 : vector<8x256xf32>
    %cst_15 = arith.constant 0.000000e+00 : f32
    %49 = vector.broadcast %cst_15 : f32 to vector<8x256xf32>
    %50 = arith.subf %49, %40 : vector<8x256xf32>
    %51 = arith.mulf %1, %43 : vector<8x256xf32>
    %cst_16 = arith.constant 1.000000e+00 : f32
    %52 = vector.broadcast %cst_16 : f32 to vector<8x256xf32>
    %53 = arith.subf %52, %1 : vector<8x256xf32>
    %54 = arith.mulf %53, %48 : vector<8x256xf32>
    %55 = arith.addf %51, %54 : vector<8x256xf32>
    %56 = arith.mulf %50, %55 : vector<8x256xf32>
    %57 = vector.shape_cast %56 : vector<8x256xf32> to vector<1x8x256xf32>
    %cst_17 = arith.constant dense<0.000000e+00> : vector<8x256xf32>
    %58 = vector.multi_reduction <add>, %57, %cst_17 [0] : vector<1x8x256xf32> to vector<8x256xf32>
    %59 = vector.extract_strided_slice %58 {offsets = [0, 0], sizes = [8, 128], strides = [1, 1]} : vector<8x256xf32> to vector<8x128xf32>
    %60 = vector.extract_strided_slice %58 {offsets = [0, 128], sizes = [8, 128], strides = [1, 1]} : vector<8x256xf32> to vector<8x128xf32>
    %61 = arith.addf %59, %60 : vector<8x128xf32>
    %62 = vector.shape_cast %61 : vector<8x128xf32> to vector<1x8x128xf32>
    %c0_18 = arith.constant 0 : index
    %c0_19 = arith.constant 0 : index
    %c0_20 = arith.constant 0 : index
    %63 = vector.load %arg4[%c0_18, %c0_19, %c0_20] : memref<1x8x128xf32, #tpu.memory_space<vmem>>, vector<1x8x128xf32>
    tpu.vector_store %arg4[%c0_18, %c0_19, %c0_20], %62 {strides = array<i32>} : memref<1x8x128xf32, #tpu.memory_space<vmem>>, vector<1x8x128xf32>,
    return
  }
  func.func @transform_0(%arg0: i32) -> (i32, i32) {
    %c0_i32 = arith.constant 0 : i32
    %c0_i32_0 = arith.constant 0 : i32
    %c0_i32_1 = arith.constant 0 : i32
    return %c0_i32, %c0_i32_0 : i32, i32
  }
  func.func @transform_1(%arg0: i32) -> (i32, i32) {
    %c0_i32 = arith.constant 0 : i32
    %c0_i32_0 = arith.constant 0 : i32
    return %arg0, %c0_i32 : i32, i32
  }
  func.func @transform_2(%arg0: i32) -> (i32, i32) {
    %c0_i32 = arith.constant 0 : i32
    %c0_i32_0 = arith.constant 0 : i32
    return %arg0, %c0_i32 : i32, i32
  }
  func.func @transform_3(%arg0: i32) -> (i32, i32, i32) {
    %c0_i32 = arith.constant 0 : i32
    %c0_i32_0 = arith.constant 0 : i32
    %c0_i32_1 = arith.constant 0 : i32
    return %arg0, %c0_i32, %c0_i32_0 : i32, i32, i32
  }
}

</mosaic_0001>

<llo_original>
// kernel: tpu_custom_call.1
$region0: #{tpu_custom_call.1}
  #allocation0 [shape = 'u32[]', space=smem, size = 0x4, offset = 0x4, fixed_abs, tag = 'smem constant byte address 0x4 - core index']
  #allocation1 [shape = 'u32[72,128]{1,0:T(1,128)}', space=vmem, size = 0x9000, scoped, tag = 'internal scratch']
  %s0 = inlined_call_operand.hbm [shape: f32[2,256], index: 0, kind: input, shape index: {}]
  %s1 = inlined_call_operand.hbm [shape: f32[8,256], index: 1, kind: input, shape index: {}]
  %s2 = inlined_call_operand.hbm [shape: f32[8,256], index: 2, kind: input, shape index: {}]
  %s3 = inlined_call_operand.hbm [shape: f32[1,8,128], index: 3, kind: output, shape index: {}]
  %s4 = sld [smem:[#allocation0]]
  $region34: #{tpu_custom_call.1} parent=0
    _
  %s6 = ssub.s32 1, %s4
  %s7 = scalar_select 0, %s6, %s4
  $region1: #{tpu_custom_call.1} parent=0
    #allocation2 [shape = 'u8[2048]{0}', space=vmem, size = 0x800, scoped, tag = 'input window, operand 0, single buffered']
    #allocation3 [shape = 's32[1]{0}', space=sflag, size = 0x4, scoped, tag = 'scoped memory for tpu_custom_call.1']
    #allocation4 [shape = 's32[1]{0}', space=sflag, size = 0x4, scoped, tag = 'scoped memory for tpu_custom_call.1']
    #allocation5 [shape = 'u8[8192]{0}', space=vmem, size = 0x2000, scoped, tag = 'input window, operand 1, single buffered']
    #allocation6 [shape = 's32[1]{0}', space=sflag, size = 0x4, scoped, tag = 'scoped memory for tpu_custom_call.1']
    #allocation7 [shape = 'u8[8192]{0}', space=vmem, size = 0x2000, scoped, tag = 'input window, operand 2, single buffered']
    #allocation8 [shape = 'u8[4096]{0}', space=vmem, size = 0x1000, scoped, tag = 'output window, operand 0, single buffered']
    %8 = vsyncpa [#allocation3], 0
    %9 = vsyncpa [#allocation6], 0
    %10 = vsyncpa [#allocation4], 0
    // Predicated region
    $region2: #{tpu_custom_call.1} parent=1 // pred_check
      _
    $region3: #{tpu_custom_call.1} parent=1 // pred_check_branch
      %12 = sbr.rel (0) target = $region5
    $region4: #{tpu_custom_call.1} parent=1 // pred_region
      %14 = vsyncadd [#allocation3], 0
      %s16 = sshll.u32 %s0, 4
      %s17 = int_to_ptr.hbm [resolvable:$true] %s16
      %s18 = sshll.u32 [#allocation2], 4
      %s19 = int_to_ptr.vmem [resolvable:$true] %s18
      %21 = dma.hbm_to_vmem [thread:$0]  %s17, 64, %s19, [#allocation3]
    $region5: #{tpu_custom_call.1} parent=1 // pred_fallthru
      _
    // Predicated region
    $region6: #{tpu_custom_call.1} parent=1 // pred_check
      _
    $region7: #{tpu_custom_call.1} parent=1 // pred_check_branch
      %23 = sbr.rel (0) target = $region9
    $region8: #{tpu_custom_call.1} parent=1 // pred_region
      %25 = vsyncadd [#allocation6], 0
      %s27 = sshll.u32 %s1, 4
      %s28 = int_to_ptr.hbm [resolvable:$true] %s27
      %s29 = sshll.u32 [#allocation5], 4
      %s30 = int_to_ptr.vmem [resolvable:$true] %s29
      %32 = dma.hbm_to_vmem [thread:$0]  %s28, 256, %s30, [#allocation6]
    $region9: #{tpu_custom_call.1} parent=1 // pred_fallthru
      _
    // Predicated region
    $region10: #{tpu_custom_call.1} parent=1 // pred_check
      _
    $region11: #{tpu_custom_call.1} parent=1 // pred_check_branch
      %34 = sbr.rel (0) target = $region13
    $region12: #{tpu_custom_call.1} parent=1 // pred_region
      %36 = vsyncadd [#allocation6], 0
      %s38 = sshll.u32 %s2, 4
      %s39 = int_to_ptr.hbm [resolvable:$true] %s38
      %s40 = sshll.u32 [#allocation7], 4
      %s41 = int_to_ptr.vmem [resolvable:$true] %s40
      %43 = dma.hbm_to_vmem [thread:$0]  %s39, 256, %s41, [#allocation6]
    $region13: #{tpu_custom_call.1} parent=1 // pred_fallthru
      _
    // Predicated region
    $region14: #{tpu_custom_call.1} parent=1 // pred_check
      _
    $region15: #{tpu_custom_call.1} parent=1 // pred_check_branch
      %45 = sbr.rel (0) target = $region17
    $region16: #{tpu_custom_call.1} parent=1 // pred_region
      %47 = dma.done [#allocation3], 64
    $region17: #{tpu_custom_call.1} parent=1 // pred_fallthru
      _
    // Predicated region
    $region18: #{tpu_custom_call.1} parent=1 // pred_check
      _
    $region19: #{tpu_custom_call.1} parent=1 // pred_check_branch
      %49 = sbr.rel (0) target = $region21
    $region20: #{tpu_custom_call.1} parent=1 // pred_region
      %51 = dma.done [#allocation6], 256
    $region21: #{tpu_custom_call.1} parent=1 // pred_fallthru
      _
    // Predicated region
    $region22: #{tpu_custom_call.1} parent=1 // pred_check
      _
    $region23: #{tpu_custom_call.1} parent=1 // pred_check_branch
      %53 = sbr.rel (0) target = $region25
    $region24: #{tpu_custom_call.1} parent=1 // pred_region
      %55 = dma.done [#allocation6], 256
    $region25: #{tpu_custom_call.1} parent=1 // pred_fallthru
      _
    %v56 = vld [vmem:[#allocation5] sm:$0xff]
    %v57 = vld [vmem:[#allocation5 + $0x8] sm:$0xff]
    %v58 = vld [vmem:[#allocation7] sm:$0xff]
    %v59 = vld [vmem:[#allocation7 + $0x8] sm:$0xff]
    %v60 = vld [vmem:[#allocation2] ss:$2 sm:$0x3]
    %s61 = scalar_lea.vmem [#allocation2], 1
    %v62 = vld [vmem:[%s61] ss:$2 sm:$0x3]
    %v63 = vmax.f32 %v58, %v59
    %64 = vmax.xlane.f32.xlu0 %v63
    %v65 = vpop.xlane.xlu0 %64
    %vm66 = vcmp.eq.f32.partialorder %v58, %v65
    %vm67 = vcmp.eq.f32.partialorder %v59, %v65
    %v68 = vsel %vm66, 1, 0
    %v69 = vsel %vm67, 1, 0
    %v70 = vcvt.s32.f32 %v68
    %v71 = vcvt.s32.f32 %v69
    %v72 = vadd.f32 %v70, %v71
    %73 = vadd.xlane.f32.xlu0 %v72
    %v74 = vpop.xlane.xlu0 %73
    %v76 = vperm.slane %v60, 0
    %v77 = vperm.slane %v60, 1
    %v80 = vmul.f32 %v70, %v76
    %v81 = vmul.f32 %v71, %v77
    %v82 = vadd.f32 %v80, %v81
    %83 = vadd.xlane.f32.xlu0 %v82
    %v84 = vpop.xlane.xlu0 %83
    %v85 = vrcp.pop %v74
    %v86 = vmul.f32 %v74, %v85
    %v87 = vsub.f32 1.0, %v86
    %v88 = vmul.f32 %v85, %v87
    %v89 = vadd.f32 %v85, %v88
    %vm90 = vweird.f32 %v74
    %vm91 = vweird.f32 %v85
    %vm92 = vmor %vm90, %vm91
    %v93 = vsel %vm92, %v85, %v89
    %v94 = vand.u32 2147483647, %v74
    %vm95 = vcmp.eq.f32.partialorder %v94, 8.507059e+37
    %v96 = vand.u32 %v74, 2147483648
    %v97 = vor.u32 1.1754944e-38, %v96
    %v98 = vsel %vm95, %v97, %v93
    %v99 = vmul.f32 %v84, %v98
    %v101 = vperm.slane %v62, 0
    %v102 = vperm.slane %v62, 1
    %v105 = vmul.f32 %v70, %v101
    %v106 = vmul.f32 %v71, %v102
    %v107 = vadd.f32 %v105, %v106
    %108 = vadd.xlane.f32.xlu0 %v107
    %v109 = vpop.xlane.xlu0 %108
    %v110 = vmul.f32 %v109, %v98
    %v111 = vsub.f32 %v76, %v99
    %v112 = vsub.f32 %v77, %v99
    %v113 = vsub.f32 %v101, %v110
    %v114 = vsub.f32 %v102, %v110
    %v115 = vmul.f32 %v111, %v111
    %v116 = vmul.f32 %v112, %v112
    %v117 = vmul.f32 %v113, %v113
    %v118 = vmul.f32 %v114, %v114
    %v119 = vadd.f32 %v115, %v117
    %v120 = vadd.f32 %v116, %v118
    %v121 = vrsqrt.pop %v119
    %v122 = vmul.f32 %v121, %v119
    %v123 = vmul.f32 %v122, %v121
    %v124 = vmul.f32 0.5, %v123
    %v125 = vsub.f32 1.5, %v124
    %v126 = vmul.f32 %v121, %v125
    %v127 = vmul.f32 %v119, %v126
    %vm128 = vcmp.eq.f32.partialorder %v119, inf
    %v129 = vsel %vm128, %v119, %v127
    %vm130 = vcmp.eq.f32.partialorder %v119, 0.0
    %v131 = vand.u32 %v119, 2147483648
    %v132 = vsel %vm130, %v131, %v129
    %v133 = vrsqrt.pop %v120
    %v134 = vmul.f32 %v133, %v120
    %v135 = vmul.f32 %v134, %v133
    %v136 = vmul.f32 0.5, %v135
    %v137 = vsub.f32 1.5, %v136
    %v138 = vmul.f32 %v133, %v137
    %v139 = vmul.f32 %v120, %v138
    %vm140 = vcmp.eq.f32.partialorder %v120, inf
    %v141 = vsel %vm140, %v120, %v139
    %vm142 = vcmp.eq.f32.partialorder %v120, 0.0
    %v143 = vand.u32 %v120, 2147483648
    %v144 = vsel %vm142, %v143, %v141
    %v145 = vadd.f32 %v132, 1.0
    %v146 = vadd.f32 %v144, 1.0
    %v147 = vrcp.pop %v145
    %v148 = vrcp.pop %v146
    %v149 = vmul.f32 %v145, %v147
    %v150 = vmul.f32 %v146, %v148
    %v151 = vsub.f32 2.0, %v149
    %v152 = vsub.f32 2.0, %v150
    %v153 = vmul.f32 %v147, %v151
    %v154 = vmul.f32 %v148, %v152
    %v155 = vmul.f32 %v153, 16.0
    %v156 = vmul.f32 %v154, 16.0
    %v157 = vlog2.pop %v56
    %v158 = vmul.f32 %v157, 0.6931472
    %v159 = vlog2.pop %v57
    %v160 = vmul.f32 %v159, 0.6931472
    %v161 = vmax.f32 %v158, -100.0
    %v162 = vmax.f32 %v160, -100.0
    %v163 = vsub.f32 1.0, %v56
    %v164 = vsub.f32 1.0, %v57
    %v165 = vlog2.pop %v163
    %v166 = vmul.f32 %v165, 0.6931472
    %v167 = vlog2.pop %v164
    %v168 = vmul.f32 %v167, 0.6931472
    %v169 = vmax.f32 %v166, -100.0
    %v170 = vmax.f32 %v168, -100.0
    %v171 = vsub.f32 0.0, %v155
    %v172 = vsub.f32 0.0, %v156
    %v173 = vmul.f32 %v58, %v161
    %v174 = vmul.f32 %v59, %v162
    %v175 = vsub.f32 1.0, %v58
    %v176 = vsub.f32 1.0, %v59
    %v177 = vmul.f32 %v175, %v169
    %v178 = vmul.f32 %v176, %v170
    %v179 = vadd.f32 %v173, %v177
    %v180 = vadd.f32 %v174, %v178
    %v181 = vmul.f32 %v171, %v179
    %v182 = vmul.f32 %v172, %v180
    %v183 = vadd.f32 %v181, 0.0
    %v184 = vadd.f32 %v182, 0.0
    %v185 = vadd.f32 %v183, %v184
    %186 = vst [vmem:[#allocation8] sm:$0xff] %v185
    // Predicated region
    $region26: #{tpu_custom_call.1} parent=1 // pred_check
      _
    $region27: #{tpu_custom_call.1} parent=1 // pred_check_branch
      %188 = sbr.rel (0) target = $region29
    $region28: #{tpu_custom_call.1} parent=1 // pred_region
      %190 = vsyncadd [#allocation4], 0
      %s192 = sshll.u32 [#allocation8], 4
      %s193 = int_to_ptr.vmem [resolvable:$true] %s192
      %s194 = sshll.u32 %s3, 4
      %s195 = int_to_ptr.hbm [resolvable:$true] %s194
      %197 = dma.vmem_to_hbm [thread:$0]  %s193, 128, %s195, [#allocation4]
    $region29: #{tpu_custom_call.1} parent=1 // pred_fallthru
      _
    // Predicated region
    $region30: #{tpu_custom_call.1} parent=1 // pred_check
      _
    $region31: #{tpu_custom_call.1} parent=1 // pred_check_branch
      %199 = sbr.rel (0) target = $region33
    $region32: #{tpu_custom_call.1} parent=1 // pred_region
      %201 = dma.done [#allocation4], 128
    $region33: #{tpu_custom_call.1} parent=1 // pred_fallthru
      _
    %202 = vsyncpa [#allocation3], 1
    %203 = vsyncpa [#allocation6], 1
    %204 = vsyncpa [#allocation4], 1

</llo_original>
